<compile_context>
chip_gen: v5e
topology: v5e:2x2
jax: 0.10.0
libtpu: 0.0.40
codegen_flags: <defaults>
</compile_context>

<pallas_src>
import math
import functools

import jax
import jax.numpy as jnp
import numpy as np
from jax import lax
from jax.experimental import pallas as pl
from jax.experimental.pallas import tpu as pltpu


# ----------------------------------------------------------------------------
# helpers
# ----------------------------------------------------------------------------
def _pick_row_tile(n, target=256):
    """Largest row tile <= target that divides n and is a multiple of 8."""
    if n % 8 != 0:
        return n                      # full block (equals array extent)
    tm = min(target, n)
    tm -= tm % 8
    while n % tm != 0:
        tm -= 8
    return tm


# ----------------------------------------------------------------------------
# fused Q/K/V projection kernel (row-tiled, weights resident)
# ----------------------------------------------------------------------------
def _qkv_kernel(xq_ref, xk_ref, xv_ref, w_ref, b_ref, q_ref, k_ref, v_ref, *,
                compute_dtype):
    for m, (x_ref, o_ref) in enumerate(
            ((xq_ref, q_ref), (xk_ref, k_ref), (xv_ref, v_ref))):
        x = x_ref[...].astype(compute_dtype)
        w = w_ref[m].astype(compute_dtype)
        o_ref[...] = (jnp.dot(x, w, preferred_element_type=jnp.float32)
                      + b_ref[m]).astype(o_ref.dtype)


def qkv_projection_pallas(xq, xk, xv, w_qkv, b_qkv, *,
                          compute_dtype=jnp.float32, row_tile=256):
    """Three projections (query/key/value) in one pipelined pallas_call."""
    n, h = xq.shape
    tm = _pick_row_tile(n, row_tile)
    b3 = b_qkv.reshape(3, 1, h)
    kernel = functools.partial(_qkv_kernel, compute_dtype=compute_dtype)
    out_sds = jax.ShapeDtypeStruct((n, h), jnp.float32)
    cost = pl.CostEstimate(
        flops=int(2 * 3 * n * h * h),
        transcendentals=0,
        bytes_accessed=int(4 * (6 * n * h + 3 * h * h + 3 * h)))
    return pl.pallas_call(
        kernel,
        out_shape=(out_sds, out_sds, out_sds),
        grid=(n // tm,),
        in_specs=[
            pl.BlockSpec((tm, h), lambda i: (i, 0)),        # query rows
            pl.BlockSpec((tm, h), lambda i: (i, 0)),        # key rows
            pl.BlockSpec((tm, h), lambda i: (i, 0)),        # value rows
            pl.BlockSpec((3, h, h), lambda i: (0, 0, 0)),   # stacked weights
            pl.BlockSpec((3, 1, h), lambda i: (0, 0, 0)),   # stacked biases
        ],
        out_specs=(
            pl.BlockSpec((tm, h), lambda i: (i, 0)),
            pl.BlockSpec((tm, h), lambda i: (i, 0)),
            pl.BlockSpec((tm, h), lambda i: (i, 0)),
        ),
        compiler_params=pltpu.CompilerParams(
            dimension_semantics=("parallel",)),
        cost_estimate=cost,
    )(xq, xk, xv, w_qkv, b3)


# ----------------------------------------------------------------------------
# row-tiled linear kernel (final projection)
# ----------------------------------------------------------------------------
def _linear_kernel(x_ref, w_ref, b_ref, o_ref, *, compute_dtype):
    x = x_ref[...].astype(compute_dtype)
    w = w_ref[...].astype(compute_dtype)
    o_ref[...] = (jnp.dot(x, w, preferred_element_type=jnp.float32)
                  + b_ref[...]).astype(o_ref.dtype)


def linear_pallas(x2d, w, b, *, compute_dtype=jnp.float32, row_tile=256):
    n, h_in = x2d.shape
    h_out = w.shape[1]
    tm = _pick_row_tile(n, row_tile)
    b2 = b.reshape(1, h_out)
    kernel = functools.partial(_linear_kernel, compute_dtype=compute_dtype)
    cost = pl.CostEstimate(
        flops=int(2 * n * h_in * h_out),
        transcendentals=0,
        bytes_accessed=int(4 * (n * h_in + h_in * h_out + h_out + n * h_out)))
    return pl.pallas_call(
        kernel,
        out_shape=jax.ShapeDtypeStruct((n, h_out), jnp.float32),
        grid=(n // tm,),
        in_specs=[
            pl.BlockSpec((tm, h_in), lambda i: (i, 0)),
            pl.BlockSpec((h_in, h_out), lambda i: (0, 0)),
            pl.BlockSpec((1, h_out), lambda i: (0, 0)),
        ],
        out_specs=pl.BlockSpec((tm, h_out), lambda i: (i, 0)),
        compiler_params=pltpu.CompilerParams(
            dimension_semantics=("parallel",)),
        cost_estimate=cost,
    )(x2d, w, b2)


# ----------------------------------------------------------------------------
# relation-aware attention kernel (per batch, per query tile, all heads fused)
# ----------------------------------------------------------------------------
def _rel_attn_kernel(q_ref, k_ref, v_ref, ids_ref, emb_k_ref, emb_v_ref, o_ref, *,
                     heads_num, per_head_size, num_rel, compute_dtype):
    d = per_head_size
    f32 = jnp.float32
    contract_last = (((1,), (1,)), ((), ()))      # A @ B^T without transpose

    ids = ids_ref[...]                                         # [tq, Sk] int32
    madd = jnp.where(ids > 0, 0.0, -10000.0).astype(f32)       # additive mask
    rel_masks = [ids == r for r in range(num_rel)]             # hoisted selects

    emb_k = emb_k_ref[...].astype(compute_dtype)               # [R, d]
    emb_v = emb_v_ref[...]                                     # [R, d] fp32

    q_all = q_ref[...]                                         # [tq, H]
    k_all = k_ref[...]                                         # [Sk, H]
    v_all = v_ref[...]                                         # [Sk, H]

    inv_sqrt_d = 1.0 / math.sqrt(float(d))
    head_outs = []
    for h in range(heads_num):
        lo, hi = h * d, (h + 1) * d
        q_h = q_all[:, lo:hi].astype(compute_dtype)            # [tq, d]
        k_h = k_all[:, lo:hi].astype(compute_dtype)            # [Sk, d]
        v_h = v_all[:, lo:hi].astype(compute_dtype)            # [Sk, d]

        scores = lax.dot_general(q_h, k_h, contract_last,
                                 preferred_element_type=f32)   # [tq, Sk]
        # q . emb_k[r] for every relation id (replaces the [S,S,d] rel_k tensor)
        q_emb = lax.dot_general(q_h, emb_k, contract_last,
                                preferred_element_type=f32)    # [tq, R]
        # scores_rel[i, j] = q_emb[i, ids[i, j]]
        scores_rel = jnp.zeros_like(scores)
        for r in range(num_rel):
            scores_rel = scores_rel + jnp.where(rel_masks[r],
                                                q_emb[:, r:r + 1], 0.0)

        logits = (scores + scores_rel * 0.25) * inv_sqrt_d + madd

        # numerically stable softmax, one reciprocal per row
        m = jnp.max(logits, axis=-1, keepdims=True)
        e = jnp.exp(logits - m)
        denom = jnp.sum(e, axis=-1, keepdims=True)
        probs = e * pl.reciprocal(denom)                       # [tq, Sk] fp32

        out = jnp.dot(probs.astype(compute_dtype), v_h,
                      preferred_element_type=f32)              # [tq, d]

        # out_rel[i] = sum_j probs[i,j] * emb_v[ids[i,j]] = hist @ emb_v
        cols = [jnp.sum(jnp.where(rel_masks[r], probs, 0.0),
                        axis=-1, keepdims=True) for r in range(num_rel)]
        hist = jnp.concatenate(cols, axis=-1)                  # [tq, R]
        out_rel = jnp.dot(hist, emb_v, preferred_element_type=f32)  # [tq, d]

        head_outs.append(out + 0.25 * out_rel)

    # lane-dense single store of all heads: [tq, heads*d] == [tq, H]
    o_ref[...] = jnp.concatenate(head_outs, axis=-1).astype(o_ref.dtype)


def rel_attention_pallas(q, k, v, ids, emb_k, emb_v, *, heads_num,
                         per_head_size, num_rel, compute_dtype=jnp.float32,
                         q_tile=256):
    """q/k/v: [B, S, H] (heads folded into the last dim); ids: [B, S, S] int32."""
    B, S, H = q.shape
    R, d = emb_k.shape
    tq = _pick_row_tile(S, q_tile)
    kernel = functools.partial(_rel_attn_kernel, heads_num=heads_num,
                               per_head_size=per_head_size, num_rel=num_rel,
                               compute_dtype=compute_dtype)
    cost = pl.CostEstimate(
        flops=int(B * heads_num * (4 * S * S * d + 4 * S * R * d)),
        transcendentals=int(B * heads_num * S * S),
        bytes_accessed=int(4 * (4 * B * S * H + B * S * S + 2 * R * d)))
    return pl.pallas_call(
        kernel,
        out_shape=jax.ShapeDtypeStruct((B, S, H), jnp.float32),
        grid=(B, S // tq),
        in_specs=[
            pl.BlockSpec((None, tq, H), lambda b, i: (b, i, 0)),  # q tile
            pl.BlockSpec((None, S, H), lambda b, i: (b, 0, 0)),   # full keys
            pl.BlockSpec((None, S, H), lambda b, i: (b, 0, 0)),   # full values
            pl.BlockSpec((None, tq, S), lambda b, i: (b, i, 0)),  # rel ids/mask
            pl.BlockSpec((R, d), lambda b, i: (0, 0)),            # emb_k table
            pl.BlockSpec((R, d), lambda b, i: (0, 0)),            # emb_v table
        ],
        out_specs=pl.BlockSpec((None, tq, H), lambda b, i: (b, i, 0)),
        compiler_params=pltpu.CompilerParams(
            dimension_semantics=("parallel", "parallel")),
        cost_estimate=cost,
    )(q, k, v, ids, emb_k, emb_v)


# ----------------------------------------------------------------------------
# module forward
# ----------------------------------------------------------------------------
def rel_aware_mha_forward(params, key, value, query, mask_ids, heads_num, *,
                          compute_dtype=jnp.float32):
    B, S, H = key.shape
    d = H // heads_num
    num_rel = params["emb_k"].shape[0]
    N = B * S

    q2d, k2d, v2d = qkv_projection_pallas(
        query.reshape(N, H), key.reshape(N, H), value.reshape(N, H),
        params["w_qkv"], params["b_qkv"], compute_dtype=compute_dtype)

    # [B, S, H] layout, heads stay folded in the last dim (no transposes).
    q = q2d.reshape(B, S, H)
    k = k2d.reshape(B, S, H)
    v = v2d.reshape(B, S, H)
    ids = mask_ids[:, 0]                                     # [B, S, S] int32

    ctx = rel_attention_pallas(
        q, k, v, ids, params["emb_k"], params["emb_v"],
        heads_num=heads_num, per_head_size=d, num_rel=num_rel,
        compute_dtype=compute_dtype)                         # [B, S, H]

    out = linear_pallas(ctx.reshape(N, H), params["wo"], params["bo"],
                        compute_dtype=compute_dtype)
    return out.reshape(B, S, H)


# ----------------------------------------------------------------------------
# pure-JAX reference (mirrors the PyTorch forward) for validation
# ----------------------------------------------------------------------------
def rel_aware_mha_reference(params, key, value, query, mask_ids, heads_num):
    B, S, H = key.shape
    d = H // heads_num
    wq, wk, wv = params["w_qkv"]
    bq, bk, bv = params["b_qkv"]

    def shape(x):
        return x.reshape(B, S, heads_num, d).transpose(0, 2, 1, 3)

    q = shape(query @ wq + bq)
    k = shape(key @ wk + bk)
    v = shape(value @ wv + bv)

    rel_k = params["emb_k"][mask_ids[:, 0]]          # [B, S, S, d]
    rel_v = params["emb_v"][mask_ids[:, 0]]

    scores = jnp.einsum("bhqd,bhkd->bhqk", q, k)
    scores_rel = jnp.einsum("bhqd,bqkd->bhqk", q, rel_k)
    scores = (scores + scores_rel / 4.0) / math.sqrt(float(d))
    maskf = (mask_ids > 0).astype(jnp.float32)       # [B, 1, S, S]
    scores = scores + (1.0 - maskf) * -10000.0
    probs = jax.nn.softmax(scores, axis=-1)
    out = jnp.einsum("bhqk,bhkd->bhqd", probs, v)
    out_rel = jnp.einsum("bhqk,bqkd->bhqd", probs, rel_v)
    combined = (out + out_rel * 0.25).transpose(0, 2, 1, 3).reshape(B, S, H)
    return combined @ params["wo"] + params["bo"]


# ----------------------------------------------------------------------------
# main
# ----------------------------------------------------------------------------
if __name__ == "__main__":
    B, S, H, heads = 2, 8, 32, 4
    d = H // heads
    num_rel = 8  # relation vocabulary size (relation id 0 == masked out)

    root = jax.random.PRNGKey(0)
    keys = jax.random.split(root, 12)
    scale = 0.05
    params = {
        # stacked (fused) Q/K/V projection weights: [3, H, H] / [3, H]
        "w_qkv": scale * jax.random.normal(keys[0], (3, H, H), jnp.float32),
        "b_qkv": scale * jax.random.normal(keys[1], (3, H), jnp.float32),
        "wo": scale * jax.random.normal(keys[2], (H, H), jnp.float32),
        "bo": scale * jax.random.normal(keys[3], (H,), jnp.float32),
        "emb_k": scale * jax.random.normal(keys[4], (num_rel, d), jnp.float32),
        "emb_v": scale * jax.random.normal(keys[5], (num_rel, d), jnp.float32),
    }

    key_in = jax.random.normal(keys[6], (B, S, H), jnp.float32)
    value_in = jax.random.normal(keys[7], (B, S, H), jnp.float32)
    query_in = jax.random.normal(keys[8], (B, S, H), jnp.float32)
    # mask doubles as relation-id tensor: [B, 1, S, S], ids in [0, num_rel)
    mask_ids = jax.random.randint(keys[9], (B, 1, S, S), 0, num_rel, jnp.int32)

    # fp32 path (bit-for-bit semantics of the PyTorch module)
    out = rel_aware_mha_forward(params, key_in, value_in, query_in, mask_ids, heads)
    out = jax.block_until_ready(out)
    ref = rel_aware_mha_reference(params, key_in, value_in, query_in, mask_ids, heads)
    np.testing.assert_allclose(np.asarray(out), np.asarray(ref), atol=1e-4, rtol=1e-4)

    # bf16 MXU-operand path (v6e/v7x optimization; softmax/accumulation stay fp32)
    out_bf16 = rel_aware_mha_forward(params, key_in, value_in, query_in, mask_ids,
                                     heads, compute_dtype=jnp.bfloat16)
    out_bf16 = jax.block_until_ready(out_bf16)
    np.testing.assert_allclose(np.asarray(out_bf16), np.asarray(ref),
                               atol=5e-2, rtol=0)

    print("KERNEL_OK")
</pallas_src>

<mosaic_0001>
module attributes {stable_mosaic.version = 11 : i64} {
  func.func @_qkv_kernel(%arg0: i32, %arg1: memref<16x32xf32, #tpu.memory_space<vmem>>, %arg2: memref<16x32xf32, #tpu.memory_space<vmem>>, %arg3: memref<16x32xf32, #tpu.memory_space<vmem>>, %arg4: memref<3x32x32xf32, #tpu.memory_space<vmem>>, %arg5: memref<3x1x32xf32, #tpu.memory_space<vmem>>, %arg6: memref<16x32xf32, #tpu.memory_space<vmem>>, %arg7: memref<16x32xf32, #tpu.memory_space<vmem>>, %arg8: memref<16x32xf32, #tpu.memory_space<vmem>>) attributes {dimension_semantics = [#tpu.dimension_semantics<parallel>], iteration_bounds = array<i64: 1>, scalar_prefetch = 0 : i64, scratch_operands = 0 : i64, tpu.core_type = #tpu.core_type<tc>, window_params = [{transform_indices = @transform_0, window_bounds = array<i64: 16, 32>}, {transform_indices = @transform_1, window_bounds = array<i64: 16, 32>}, {transform_indices = @transform_2, window_bounds = array<i64: 16, 32>}, {pipeline_mode = #tpu.pipeline_mode<synchronous>, transform_indices = @transform_3, window_bounds = array<i64: 3, 32, 32>}, {pipeline_mode = #tpu.pipeline_mode<synchronous>, transform_indices = @transform_4, window_bounds = array<i64: 3, 1, 32>}, {transform_indices = @transform_5, window_bounds = array<i64: 16, 32>}, {transform_indices = @transform_6, window_bounds = array<i64: 16, 32>}, {transform_indices = @transform_7, window_bounds = array<i64: 16, 32>}]} {
    %c0 = arith.constant 0 : index
    %c0_0 = arith.constant 0 : index
    %0 = vector.load %arg1[%c0, %c0_0] : memref<16x32xf32, #tpu.memory_space<vmem>>, vector<16x32xf32>
    %c0_1 = arith.constant 0 : index
    %c0_2 = arith.constant 0 : index
    %c0_3 = arith.constant 0 : index
    %1 = vector.load %arg4[%c0_1, %c0_2, %c0_3] : memref<3x32x32xf32, #tpu.memory_space<vmem>>, vector<1x32x32xf32>
    %2 = vector.shape_cast %1 : vector<1x32x32xf32> to vector<32x32xf32>
    %cst = arith.constant dense<0.000000e+00> : vector<16x32xf32>
    %3 = tpu.matmul %0, %2, %cst {dimension_numbers = #tpu.dot_dimension_numbers<[1], [0], [0], [1], [0, 0, 1, 1], [], []>} : vector<16x32xf32>, vector<32x32xf32>, vector<16x32xf32> -> vector<16x32xf32>
    %c0_4 = arith.constant 0 : index
    %c0_5 = arith.constant 0 : index
    %c0_6 = arith.constant 0 : index
    %4 = vector.load %arg5[%c0_4, %c0_5, %c0_6] : memref<3x1x32xf32, #tpu.memory_space<vmem>>, vector<1x1x32xf32>
    %5 = vector.shape_cast %4 : vector<1x1x32xf32> to vector<1x32xf32>
    %6 = vector.broadcast %5 : vector<1x32xf32> to vector<16x32xf32>
    %7 = arith.addf %3, %6 : vector<16x32xf32>
    %c0_7 = arith.constant 0 : index
    %c0_8 = arith.constant 0 : index
    %8 = vector.load %arg6[%c0_7, %c0_8] : memref<16x32xf32, #tpu.memory_space<vmem>>, vector<16x32xf32>
    tpu.vector_store %arg6[%c0_7, %c0_8], %7 {strides = array<i32>} : memref<16x32xf32, #tpu.memory_space<vmem>>, vector<16x32xf32>,
    %c0_9 = arith.constant 0 : index
    %c0_10 = arith.constant 0 : index
    %9 = vector.load %arg2[%c0_9, %c0_10] : memref<16x32xf32, #tpu.memory_space<vmem>>, vector<16x32xf32>
    %c1 = arith.constant 1 : index
    %c0_11 = arith.constant 0 : index
    %c0_12 = arith.constant 0 : index
    %10 = vector.load %arg4[%c1, %c0_11, %c0_12] : memref<3x32x32xf32, #tpu.memory_space<vmem>>, vector<1x32x32xf32>
    %11 = vector.shape_cast %10 : vector<1x32x32xf32> to vector<32x32xf32>
    %cst_13 = arith.constant dense<0.000000e+00> : vector<16x32xf32>
    %12 = tpu.matmul %9, %11, %cst_13 {dimension_numbers = #tpu.dot_dimension_numbers<[1], [0], [0], [1], [0, 0, 1, 1], [], []>} : vector<16x32xf32>, vector<32x32xf32>, vector<16x32xf32> -> vector<16x32xf32>
    %c1_14 = arith.constant 1 : index
    %c0_15 = arith.constant 0 : index
    %c0_16 = arith.constant 0 : index
    %13 = vector.load %arg5[%c1_14, %c0_15, %c0_16] : memref<3x1x32xf32, #tpu.memory_space<vmem>>, vector<1x1x32xf32>
    %14 = vector.shape_cast %13 : vector<1x1x32xf32> to vector<1x32xf32>
    %15 = vector.broadcast %14 : vector<1x32xf32> to vector<16x32xf32>
    %16 = arith.addf %12, %15 : vector<16x32xf32>
    %c0_17 = arith.constant 0 : index
    %c0_18 = arith.constant 0 : index
    %17 = vector.load %arg7[%c0_17, %c0_18] : memref<16x32xf32, #tpu.memory_space<vmem>>, vector<16x32xf32>
    tpu.vector_store %arg7[%c0_17, %c0_18], %16 {strides = array<i32>} : memref<16x32xf32, #tpu.memory_space<vmem>>, vector<16x32xf32>,
    %c0_19 = arith.constant 0 : index
    %c0_20 = arith.constant 0 : index
    %18 = vector.load %arg3[%c0_19, %c0_20] : memref<16x32xf32, #tpu.memory_space<vmem>>, vector<16x32xf32>
    %c2 = arith.constant 2 : index
    %c0_21 = arith.constant 0 : index
    %c0_22 = arith.constant 0 : index
    %19 = vector.load %arg4[%c2, %c0_21, %c0_22] : memref<3x32x32xf32, #tpu.memory_space<vmem>>, vector<1x32x32xf32>
    %20 = vector.shape_cast %19 : vector<1x32x32xf32> to vector<32x32xf32>
    %cst_23 = arith.constant dense<0.000000e+00> : vector<16x32xf32>
    %21 = tpu.matmul %18, %20, %cst_23 {dimension_numbers = #tpu.dot_dimension_numbers<[1], [0], [0], [1], [0, 0, 1, 1], [], []>} : vector<16x32xf32>, vector<32x32xf32>, vector<16x32xf32> -> vector<16x32xf32>
    %c2_24 = arith.constant 2 : index
    %c0_25 = arith.constant 0 : index
    %c0_26 = arith.constant 0 : index
    %22 = vector.load %arg5[%c2_24, %c0_25, %c0_26] : memref<3x1x32xf32, #tpu.memory_space<vmem>>, vector<1x1x32xf32>
    %23 = vector.shape_cast %22 : vector<1x1x32xf32> to vector<1x32xf32>
    %24 = vector.broadcast %23 : vector<1x32xf32> to vector<16x32xf32>
    %25 = arith.addf %21, %24 : vector<16x32xf32>
    %c0_27 = arith.constant 0 : index
    %c0_28 = arith.constant 0 : index
    %26 = vector.load %arg8[%c0_27, %c0_28] : memref<16x32xf32, #tpu.memory_space<vmem>>, vector<16x32xf32>
    tpu.vector_store %arg8[%c0_27, %c0_28], %25 {strides = array<i32>} : memref<16x32xf32, #tpu.memory_space<vmem>>, vector<16x32xf32>,
    return
  }
  func.func @transform_0(%arg0: i32) -> (i32, i32) {
    %c0_i32 = arith.constant 0 : i32
    %c0_i32_0 = arith.constant 0 : i32
    return %arg0, %c0_i32 : i32, i32
  }
  func.func @transform_1(%arg0: i32) -> (i32, i32) {
    %c0_i32 = arith.constant 0 : i32
    %c0_i32_0 = arith.constant 0 : i32
    return %arg0, %c0_i32 : i32, i32
  }
  func.func @transform_2(%arg0: i32) -> (i32, i32) {
    %c0_i32 = arith.constant 0 : i32
    %c0_i32_0 = arith.constant 0 : i32
    return %arg0, %c0_i32 : i32, i32
  }
  func.func @transform_3(%arg0: i32) -> (i32, i32, i32) {
    %c0_i32 = arith.constant 0 : i32
    %c0_i32_0 = arith.constant 0 : i32
    %c0_i32_1 = arith.constant 0 : i32
    %c0_i32_2 = arith.constant 0 : i32
    return %c0_i32, %c0_i32_0, %c0_i32_1 : i32, i32, i32
  }
  func.func @transform_4(%arg0: i32) -> (i32, i32, i32) {
    %c0_i32 = arith.constant 0 : i32
    %c0_i32_0 = arith.constant 0 : i32
    %c0_i32_1 = arith.constant 0 : i32
    %c0_i32_2 = arith.constant 0 : i32
    return %c0_i32, %c0_i32_0, %c0_i32_1 : i32, i32, i32
  }
  func.func @transform_5(%arg0: i32) -> (i32, i32) {
    %c0_i32 = arith.constant 0 : i32
    %c0_i32_0 = arith.constant 0 : i32
    return %arg0, %c0_i32 : i32, i32
  }
  func.func @transform_6(%arg0: i32) -> (i32, i32) {
    %c0_i32 = arith.constant 0 : i32
    %c0_i32_0 = arith.constant 0 : i32
    return %arg0, %c0_i32 : i32, i32
  }
  func.func @transform_7(%arg0: i32) -> (i32, i32) {
    %c0_i32 = arith.constant 0 : i32
    %c0_i32_0 = arith.constant 0 : i32
    return %arg0, %c0_i32 : i32, i32
  }
}

</mosaic_0001>

<llo_original>
// kernel: tpu_custom_call.1
$region0: #{tpu_custom_call.1}
  #allocation0 [shape = 'u32[]', space=smem, size = 0x4, offset = 0x4, fixed_abs, tag = 'smem constant byte address 0x4 - core index']
  #allocation1 [shape = 'u32[72,128]{1,0:T(1,128)}', space=vmem, size = 0x9000, scoped, tag = 'internal scratch']
  %s0 = inlined_call_operand.hbm [shape: f32[16,32], index: 0, kind: input, shape index: {}]
  %s1 = inlined_call_operand.hbm [shape: f32[16,32], index: 1, kind: input, shape index: {}]
  %s2 = inlined_call_operand.hbm [shape: f32[16,32], index: 2, kind: input, shape index: {}]
  %s3 = inlined_call_operand.hbm [shape: f32[3,32,32], index: 3, kind: input, shape index: {}]
  %s4 = inlined_call_operand.vmem [shape: f32[3,1,32], index: 4, kind: input, shape index: {}]
  %s5 = inlined_call_operand.hbm [shape: f32[16,32], index: 5, kind: output, shape index: {0}]
  %s6 = inlined_call_operand.hbm [shape: f32[16,32], index: 6, kind: output, shape index: {1}]
  %s7 = inlined_call_operand.hbm [shape: f32[16,32], index: 7, kind: output, shape index: {2}]
  %8 = xla_tuple %s5, %s6, %s7
  %s9 = sld [smem:[#allocation0]]
  $region62: #{tpu_custom_call.1} parent=0
    _
  %s11 = ssub.s32 1, %s9
  %s12 = scalar_select 0, %s11, %s9
  $region1: #{tpu_custom_call.1} parent=0
    #allocation2 [shape = 'u8[8192]{0}', space=vmem, size = 0x2000, scoped, tag = 'input window, operand 0, single buffered']
    #allocation3 [shape = 's32[1]{0}', space=sflag, size = 0x4, scoped, tag = 'scoped memory for tpu_custom_call.1']
    #allocation4 [shape = 's32[1]{0}', space=sflag, size = 0x4, scoped, tag = 'scoped memory for tpu_custom_call.1']
    #allocation5 [shape = 'u8[8192]{0}', space=vmem, size = 0x2000, scoped, tag = 'input window, operand 1, single buffered']
    #allocation6 [shape = 's32[1]{0}', space=sflag, size = 0x4, scoped, tag = 'scoped memory for tpu_custom_call.1']
    #allocation7 [shape = 'u8[8192]{0}', space=vmem, size = 0x2000, scoped, tag = 'input window, operand 2, single buffered']
    #allocation8 [shape = 'u8[49152]{0}', space=vmem, size = 0xc000, scoped, tag = 'input window, operand 3, single buffered']
    #allocation9 [shape = 's32[1]{0}', space=sflag, size = 0x4, scoped, tag = 'scoped memory for tpu_custom_call.1']
    #allocation10 [shape = 'u8[8192]{0}', space=vmem, size = 0x2000, scoped, tag = 'output window, operand 0, single buffered']
    #allocation11 [shape = 'u8[8192]{0}', space=vmem, size = 0x2000, scoped, tag = 'output window, operand 1, single buffered']
    #allocation12 [shape = 's32[1]{0}', space=sflag, size = 0x4, scoped, tag = 'scoped memory for tpu_custom_call.1']
    #allocation13 [shape = 'u8[8192]{0}', space=vmem, size = 0x2000, scoped, tag = 'output window, operand 2, single buffered']
    %13 = vsyncpa [#allocation3], 0
    %14 = vsyncpa [#allocation6], 0
    %15 = vsyncpa [#allocation9], 0
    %16 = vsyncpa [#allocation4], 0
    %17 = vsyncpa [#allocation12], 0
    // Predicated region
    $region2: #{tpu_custom_call.1} parent=1 // pred_check
      _
    $region3: #{tpu_custom_call.1} parent=1 // pred_check_branch
      %19 = sbr.rel (0) target = $region5
    $region4: #{tpu_custom_call.1} parent=1 // pred_region
      %21 = vsyncadd [#allocation3], 0
      %s22 = sshll.u32 %s0, 4
      %s23 = int_to_ptr.hbm [resolvable:$true] %s22
      %s24 = sshll.u32 [#allocation2], 4
      %s25 = int_to_ptr.vmem [resolvable:$true] %s24
      %30 = dma.hbm_to_vmem [thread:$0]  %s23, 256, %s25, [#allocation3], 128, 128, 8
    $region5: #{tpu_custom_call.1} parent=1 // pred_fallthru
      _
    // Predicated region
    $region6: #{tpu_custom_call.1} parent=1 // pred_check
      _
    $region7: #{tpu_custom_call.1} parent=1 // pred_check_branch
      %32 = sbr.rel (0) target = $region9
    $region8: #{tpu_custom_call.1} parent=1 // pred_region
      %34 = vsyncadd [#allocation6], 0
      %s35 = sshll.u32 %s1, 4
      %s36 = int_to_ptr.hbm [resolvable:$true] %s35
      %s37 = sshll.u32 [#allocation5], 4
      %s38 = int_to_ptr.vmem [resolvable:$true] %s37
      %43 = dma.hbm_to_vmem [thread:$0]  %s36, 256, %s38, [#allocation6], 128, 128, 8
    $region9: #{tpu_custom_call.1} parent=1 // pred_fallthru
      _
    // Predicated region
    $region10: #{tpu_custom_call.1} parent=1 // pred_check
      _
    $region11: #{tpu_custom_call.1} parent=1 // pred_check_branch
      %45 = sbr.rel (0) target = $region13
    $region12: #{tpu_custom_call.1} parent=1 // pred_region
      %47 = vsyncadd [#allocation6], 0
      %s48 = sshll.u32 %s2, 4
      %s49 = int_to_ptr.hbm [resolvable:$true] %s48
      %s50 = sshll.u32 [#allocation7], 4
      %s51 = int_to_ptr.vmem [resolvable:$true] %s50
      %56 = dma.hbm_to_vmem [thread:$0]  %s49, 256, %s51, [#allocation6], 128, 128, 8
    $region13: #{tpu_custom_call.1} parent=1 // pred_fallthru
      _
    // Predicated region
    $region14: #{tpu_custom_call.1} parent=1 // pred_check
      _
    $region15: #{tpu_custom_call.1} parent=1 // pred_check_branch
      %58 = sbr.rel (0) target = $region17
    $region16: #{tpu_custom_call.1} parent=1 // pred_region
      %60 = vsyncadd [#allocation9], 0
      %s61 = sshll.u32 %s3, 4
      %s62 = int_to_ptr.hbm [resolvable:$true] %s61
      %s63 = sshll.u32 [#allocation8], 4
      %s64 = int_to_ptr.vmem [resolvable:$true] %s63
      %69 = dma.hbm_to_vmem [thread:$0]  %s62, 1536, %s64, [#allocation9], 128, 128, 8
    $region17: #{tpu_custom_call.1} parent=1 // pred_fallthru
      _
    // Predicated region
    $region18: #{tpu_custom_call.1} parent=1 // pred_check
      _
    $region19: #{tpu_custom_call.1} parent=1 // pred_check_branch
      %71 = sbr.rel (0) target = $region21
    $region20: #{tpu_custom_call.1} parent=1 // pred_region
      _
    $region21: #{tpu_custom_call.1} parent=1 // pred_fallthru
      _
    // Predicated region
    $region22: #{tpu_custom_call.1} parent=1 // pred_check
      _
    $region23: #{tpu_custom_call.1} parent=1 // pred_check_branch
      %73 = sbr.rel (0) target = $region25
    $region24: #{tpu_custom_call.1} parent=1 // pred_region
      %75 = dma.done [#allocation3], 256
    $region25: #{tpu_custom_call.1} parent=1 // pred_fallthru
      _
    // Predicated region
    $region26: #{tpu_custom_call.1} parent=1 // pred_check
      _
    $region27: #{tpu_custom_call.1} parent=1 // pred_check_branch
      %77 = sbr.rel (0) target = $region29
    $region28: #{tpu_custom_call.1} parent=1 // pred_region
      %79 = dma.done [#allocation6], 256
    $region29: #{tpu_custom_call.1} parent=1 // pred_fallthru
      _
    // Predicated region
    $region30: #{tpu_custom_call.1} parent=1 // pred_check
      _
    $region31: #{tpu_custom_call.1} parent=1 // pred_check_branch
      %81 = sbr.rel (0) target = $region33
    $region32: #{tpu_custom_call.1} parent=1 // pred_region
      %83 = dma.done [#allocation6], 256
    $region33: #{tpu_custom_call.1} parent=1 // pred_fallthru
      _
    // Predicated region
    $region34: #{tpu_custom_call.1} parent=1 // pred_check
      _
    $region35: #{tpu_custom_call.1} parent=1 // pred_check_branch
      %85 = sbr.rel (0) target = $region37
    $region36: #{tpu_custom_call.1} parent=1 // pred_region
      %87 = dma.done [#allocation9], 1536
    $region37: #{tpu_custom_call.1} parent=1 // pred_fallthru
      _
    %v88 = vld [vmem:[#allocation2] sm:$0xff]
    %v89 = vld [vmem:[#allocation2 + $0x8] sm:$0xff]
    %v90 = vld [vmem:[#allocation8] sm:$0xff]
    %v91 = vld [vmem:[#allocation8 + $0x8] sm:$0xff]
    %v92 = vld [vmem:[#allocation8 + $0x10] sm:$0xff]
    %v93 = vld [vmem:[#allocation8 + $0x18] sm:$0xff]
    %v94 = vld [vmem:[%s4] sm:$0x1]
    %v96 = vperm.slane %v94, 0
    %vm98 = vcmask 261120
    %v100 = vsel %vm98, %v88, 0
    %v103 = vsel %vm98, %v89, 0
    %105 = vmatpush.msra.mxu0 0.0
    %106 = vmatpush.msra.mxu0 0.0
    %107 = vmatpush.msra.mxu0 0.0
    %108 = vmatpush.msra.mxu0 0.0
    %109 = vmatpush.msra.mxu0 0.0
    %110 = vmatpush.msra.mxu0 0.0
    %111 = vmatpush.msra.mxu0 0.0
    %112 = vmatpush.msra.mxu0 0.0
    %113 = vmatpush.msra.mxu0 0.0
    %114 = vmatpush.msra.mxu0 0.0
    %115 = vmatpush.msra.mxu0 0.0
    %116 = vmatpush.msra.mxu0 0.0
    %117 = vmatpush.msra.mxu0 %v93
    %118 = vmatpush.msra.mxu0 %v92
    %119 = vmatpush.msra.mxu0 %v91
    %120 = vmatpush.msra.mxu0 %v90
    %121 = vmatmul.f32.gmra.mxu0 %v100
    %v122 = vpop.f32.mrf.mxu0
    %v123 = vadd.f32 %v96, %v122
    %124 = vmatmul.f32.gmra.mxu0 %v103
    %v125 = vpop.f32.mrf.mxu0
    %v126 = vadd.f32 %v96, %v125
    %127 = vdwg.mxu0
    %128 = vst.msk [vmem:[#allocation10] sm:$0xff] %vm98, %v123
    %129 = vst.msk [vmem:[#allocation10 + $0x8] sm:$0xff] %vm98, %v126
    %v130 = vld [vmem:[#allocation5] sm:$0xff]
    %v131 = vld [vmem:[#allocation5 + $0x8] sm:$0xff]
    %s132 = scalar_lea.vmem [#allocation8], 32
    %v133 = vld [vmem:[%s132] sm:$0xff]
    %v134 = vld [vmem:[%s132 + $0x8] sm:$0xff]
    %v135 = vld [vmem:[%s132 + $0x10] sm:$0xff]
    %v136 = vld [vmem:[%s132 + $0x18] sm:$0xff]
    %s137 = scalar_lea.vmem %s4, 1
    %v138 = vld [vmem:[%s137] sm:$0x1]
    %v140 = vperm.slane %v138, 0
    %v143 = vsel %vm98, %v130, 0
    %v146 = vsel %vm98, %v131, 0
    %148 = vmatpush.msra.mxu0 0.0
    %149 = vmatpush.msra.mxu0 0.0
    %150 = vmatpush.msra.mxu0 0.0
    %151 = vmatpush.msra.mxu0 0.0
    %152 = vmatpush.msra.mxu0 0.0
    %153 = vmatpush.msra.mxu0 0.0
    %154 = vmatpush.msra.mxu0 0.0
    %155 = vmatpush.msra.mxu0 0.0
    %156 = vmatpush.msra.mxu0 0.0
    %157 = vmatpush.msra.mxu0 0.0
    %158 = vmatpush.msra.mxu0 0.0
    %159 = vmatpush.msra.mxu0 0.0
    %160 = vmatpush.msra.mxu0 %v136
    %161 = vmatpush.msra.mxu0 %v135
    %162 = vmatpush.msra.mxu0 %v134
    %163 = vmatpush.msra.mxu0 %v133
    %164 = vmatmul.f32.gmra.mxu0 %v143
    %v165 = vpop.f32.mrf.mxu0
    %v166 = vadd.f32 %v140, %v165
    %167 = vmatmul.f32.gmra.mxu0 %v146
    %v168 = vpop.f32.mrf.mxu0
    %v169 = vadd.f32 %v140, %v168
    %170 = vdwg.mxu0
    %171 = vst.msk [vmem:[#allocation11] sm:$0xff] %vm98, %v166
    %172 = vst.msk [vmem:[#allocation11 + $0x8] sm:$0xff] %vm98, %v169
    %v173 = vld [vmem:[#allocation7] sm:$0xff]
    %v174 = vld [vmem:[#allocation7 + $0x8] sm:$0xff]
    %s175 = scalar_lea.vmem [#allocation8], 64
    %v176 = vld [vmem:[%s175] sm:$0xff]
    %v177 = vld [vmem:[%s175 + $0x8] sm:$0xff]
    %v178 = vld [vmem:[%s175 + $0x10] sm:$0xff]
    %v179 = vld [vmem:[%s175 + $0x18] sm:$0xff]
    %s180 = scalar_lea.vmem %s4, 2
    %v181 = vld [vmem:[%s180] sm:$0x1]
    %v183 = vperm.slane %v181, 0
    %v186 = vsel %vm98, %v173, 0
    %v189 = vsel %vm98, %v174, 0
    %191 = vmatpush.msra.mxu0 0.0
    %192 = vmatpush.msra.mxu0 0.0
    %193 = vmatpush.msra.mxu0 0.0
    %194 = vmatpush.msra.mxu0 0.0
    %195 = vmatpush.msra.mxu0 0.0
    %196 = vmatpush.msra.mxu0 0.0
    %197 = vmatpush.msra.mxu0 0.0
    %198 = vmatpush.msra.mxu0 0.0
    %199 = vmatpush.msra.mxu0 0.0
    %200 = vmatpush.msra.mxu0 0.0
    %201 = vmatpush.msra.mxu0 0.0
    %202 = vmatpush.msra.mxu0 0.0
    %203 = vmatpush.msra.mxu0 %v179
    %204 = vmatpush.msra.mxu0 %v178
    %205 = vmatpush.msra.mxu0 %v177
    %206 = vmatpush.msra.mxu0 %v176
    %207 = vmatmul.f32.gmra.mxu0 %v186
    %v208 = vpop.f32.mrf.mxu0
    %v209 = vadd.f32 %v183, %v208
    %210 = vmatmul.f32.gmra.mxu0 %v189
    %v211 = vpop.f32.mrf.mxu0
    %v212 = vadd.f32 %v183, %v211
    %213 = vdwg.mxu0
    %214 = vst.msk [vmem:[#allocation13] sm:$0xff] %vm98, %v209
    %215 = vst.msk [vmem:[#allocation13 + $0x8] sm:$0xff] %vm98, %v212
    // Predicated region
    $region38: #{tpu_custom_call.1} parent=1 // pred_check
      _
    $region39: #{tpu_custom_call.1} parent=1 // pred_check_branch
      %217 = sbr.rel (0) target = $region41
    $region40: #{tpu_custom_call.1} parent=1 // pred_region
      %219 = vsyncadd [#allocation4], 0
      %s220 = sshll.u32 [#allocation10], 4
      %s221 = int_to_ptr.vmem [resolvable:$true] %s220
      %s222 = sshll.u32 %s5, 4
      %s223 = int_to_ptr.hbm [resolvable:$true] %s222
      %228 = dma.vmem_to_hbm [thread:$0]  %s221, 256, %s223, [#allocation4], 128, 128, 8
    $region41: #{tpu_custom_call.1} parent=1 // pred_fallthru
      _
    // Predicated region
    $region42: #{tpu_custom_call.1} parent=1 // pred_check
      _
    $region43: #{tpu_custom_call.1} parent=1 // pred_check_branch
      %230 = sbr.rel (0) target = $region45
    $region44: #{tpu_custom_call.1} parent=1 // pred_region
      %232 = vsyncadd [#allocation12], 0
      %s233 = sshll.u32 [#allocation11], 4
      %s234 = int_to_ptr.vmem [resolvable:$true] %s233
      %s235 = sshll.u32 %s6, 4
      %s236 = int_to_ptr.hbm [resolvable:$true] %s235
      %241 = dma.vmem_to_hbm [thread:$0]  %s234, 256, %s236, [#allocation12], 128, 128, 8
    $region45: #{tpu_custom_call.1} parent=1 // pred_fallthru
      _
    // Predicated region
    $region46: #{tpu_custom_call.1} parent=1 // pred_check
      _
    $region47: #{tpu_custom_call.1} parent=1 // pred_check_branch
      %243 = sbr.rel (0) target = $region49
    $region48: #{tpu_custom_call.1} parent=1 // pred_region
      %245 = vsyncadd [#allocation12], 0
      %s246 = sshll.u32 [#allocation13], 4
      %s247 = int_to_ptr.vmem [resolvable:$true] %s246
      %s248 = sshll.u32 %s7, 4
      %s249 = int_to_ptr.hbm [resolvable:$true] %s248
      %254 = dma.vmem_to_hbm [thread:$0]  %s247, 256, %s249, [#allocation12], 128, 128, 8
    $region49: #{tpu_custom_call.1} parent=1 // pred_fallthru
      _
    // Predicated region
    $region50: #{tpu_custom_call.1} parent=1 // pred_check
      _
    $region51: #{tpu_custom_call.1} parent=1 // pred_check_branch
      %256 = sbr.rel (0) target = $region53
    $region52: #{tpu_custom_call.1} parent=1 // pred_region
      %258 = dma.done [#allocation4], 256
    $region53: #{tpu_custom_call.1} parent=1 // pred_fallthru
      _
    // Predicated region
    $region54: #{tpu_custom_call.1} parent=1 // pred_check
      _
    $region55: #{tpu_custom_call.1} parent=1 // pred_check_branch
      %260 = sbr.rel (0) target = $region57
    $region56: #{tpu_custom_call.1} parent=1 // pred_region
      %262 = dma.done [#allocation12], 256
    $region57: #{tpu_custom_call.1} parent=1 // pred_fallthru
      _
    // Predicated region
    $region58: #{tpu_custom_call.1} parent=1 // pred_check
      _
    $region59: #{tpu_custom_call.1} parent=1 // pred_check_branch
      %264 = sbr.rel (0) target = $region61
    $region60: #{tpu_custom_call.1} parent=1 // pred_region
      %266 = dma.done [#allocation12], 256
    $region61: #{tpu_custom_call.1} parent=1 // pred_fallthru
      _
    %267 = vsyncpa [#allocation3], 1
    %268 = vsyncpa [#allocation6], 1
    %269 = vsyncpa [#allocation9], 1
    %270 = vsyncpa [#allocation4], 1
    %271 = vsyncpa [#allocation12], 1

</llo_original>
